<compile_context>
chip_gen: v6e
topology: v6e:2x2x1
jax: 0.10.0
libtpu: 0.0.40
codegen_flags: <defaults>
</compile_context>

<pallas_src>
import functools

import jax
import jax.numpy as jnp
from jax.experimental import pallas as pl
from jax.experimental.pallas import tpu as pltpu


# ----------------------------------------------------------------------------
# Kernel
# ----------------------------------------------------------------------------
def _rpn_head_kernel(x_ref, cw_ref, cb_ref, rw_ref, rb_ref,
                     cls_ref, reg_ref, *, use_mxu):
    # x_ref:   (1, C, TS)    one spatial tile of one image (NCHW, HW flattened)
    # cw_ref:  (A, C)        cls weight^T        cb_ref: (A, 1)
    # rw_ref:  (4A, C)       reg weight^T        rb_ref: (4A, 1)
    # cls_ref: (1, A, TS)    reg_ref: (1, 4A, TS)
    x = x_ref[0]            # (C, TS)
    cw = cw_ref[...]        # (A, C)
    rw = rw_ref[...]        # (4A, C)

    if use_mxu:
        acc_c = jnp.dot(cw, x, preferred_element_type=jnp.float32)
        acc_r = jnp.dot(rw, x, preferred_element_type=jnp.float32)
    else:
        # Tiny C (e.g. 4): unrolled VPU broadcast-mul-add; avoids MXU push/pop
        # latency for a <1%-utilization systolic matmul.  Kernel stays
        # memory-bound either way.
        acc_c = cw[:, 0:1] * x[0:1, :]
        acc_r = rw[:, 0:1] * x[0:1, :]
        for c in range(1, x.shape[0]):
            xc = x[c:c + 1, :]
            acc_c = acc_c + cw[:, c:c + 1] * xc
            acc_r = acc_r + rw[:, c:c + 1] * xc

    cls_ref[0] = (acc_c + cb_ref[...]).astype(cls_ref.dtype)
    reg_ref[0] = (acc_r + rb_ref[...]).astype(reg_ref.dtype)


# ----------------------------------------------------------------------------
# Tiling / VMEM sizing helpers
# ----------------------------------------------------------------------------
def _vmem_config():
    """Scoped VMEM limit to request and byte budget for pipelined blocks."""
    try:
        cap = int(getattr(pltpu.get_tpu_info(), "vmem_capacity_bytes", 64 << 20))
    except Exception:  # pragma: no cover - conservative fallback (v7x per-TC)
        cap = 64 << 20
    limit = min(cap // 2, 96 << 20)      # leave headroom vs. physical VMEM
    budget = (limit * 3) // 5            # bytes for double-buffered blocks
    return limit, budget


def _pick_spatial_tile(S, C, O, block_budget_bytes):
    """Largest lane-dense spatial tile whose double-buffered blocks fit."""
    bytes_per_col = 2 * (C + O) * 4      # in + out, f32, double-buffered
    ts = block_budget_bytes // max(bytes_per_col, 1)
    ts = max(512, (ts // 512) * 512)     # multiple of 512 (hence of 128) lanes
    ts = min(ts, 8192)                   # per-step overhead already amortized
    if S <= ts:
        return S                         # whole level: one full-extent block
    return ts


# ----------------------------------------------------------------------------
# Per-level fused 1x1-conv heads (cls + reg) as one pallas_call
# ----------------------------------------------------------------------------
def _rpn_level_conv1x1(x, cls_wt, cls_b, reg_wt, reg_b):
    """x: (N, C, S) f32 -> (cls (N, A, S), reg (N, 4A, S))."""
    N, C, S = x.shape
    A = cls_wt.shape[0]
    A4 = reg_wt.shape[0]

    limit, budget = _vmem_config()
    ts = _pick_spatial_tile(S, C, A + A4, budget)
    grid_s = pl.cdiv(S, ts)
    use_mxu = C >= 32                    # VPU broadcast-MAC only for tiny C

    kernel = functools.partial(_rpn_head_kernel, use_mxu=use_mxu)
    return pl.pallas_call(
        kernel,
        out_shape=(
            jax.ShapeDtypeStruct((N, A, S), x.dtype),
            jax.ShapeDtypeStruct((N, A4, S), x.dtype),
        ),
        grid_spec=pltpu.PrefetchScalarGridSpec(
            num_scalar_prefetch=0,
            grid=(N, grid_s),
            in_specs=[
                pl.BlockSpec((1, C, ts), lambda n, s: (n, 0, s)),  # activations
                pl.BlockSpec((A, C), lambda n, s: (0, 0)),         # cls W^T
                pl.BlockSpec((A, 1), lambda n, s: (0, 0)),         # cls bias
                pl.BlockSpec((A4, C), lambda n, s: (0, 0)),        # reg W^T
                pl.BlockSpec((A4, 1), lambda n, s: (0, 0)),        # reg bias
            ],
            out_specs=[
                pl.BlockSpec((1, A, ts), lambda n, s: (n, 0, s)),
                pl.BlockSpec((1, A4, ts), lambda n, s: (n, 0, s)),
            ],
        ),
        compiler_params=pltpu.CompilerParams(
            dimension_semantics=("parallel", "parallel"),
            vmem_limit_bytes=limit,
        ),
    )(x, cls_wt, cls_b, reg_wt, reg_b)


# ----------------------------------------------------------------------------
# Module wrapper (mirror of PyTorch RPNHead)
# ----------------------------------------------------------------------------
class RPNHeadPallas:
    """cls = Conv2d(ch, A, 1), reg = Conv2d(ch, 4A, 1), applied per level."""

    def __init__(self, ch, num_anchor, key):
        k1, k2, k3, k4 = jax.random.split(key, 4)
        self.num_anchor = num_anchor
        # Reference layout (in, out); kernel consumes W^T = (out, in).
        self.cls_w = jax.random.normal(k1, (ch, num_anchor * 1), jnp.float32) * 0.05
        self.cls_b = jax.random.normal(k2, (num_anchor * 1,), jnp.float32) * 0.01
        self.reg_w = jax.random.normal(k3, (ch, num_anchor * 4), jnp.float32) * 0.05
        self.reg_b = jax.random.normal(k4, (num_anchor * 4,), jnp.float32) * 0.01
        self.cls_wt = self.cls_w.T                     # (A, C)
        self.reg_wt = self.reg_w.T                     # (4A, C)
        self.cls_b2 = self.cls_b.reshape(-1, 1)        # (A, 1)
        self.reg_b2 = self.reg_b.reshape(-1, 1)        # (4A, 1)
        # TODO(synk): optionally cast activations/outputs to bf16 on v5e for
        # a further memory-bandwidth win (kept f32 to match PyTorch semantics).

    def __call__(self, x_list):
        A = self.num_anchor
        cls_out, reg_out = [], []
        for y in x_list:
            N, C, H, W = (int(d) for d in y.shape)
            # NCHW kept: flattening HW is a free row-major reshape (no copy).
            x = y.reshape(N, C, H * W)
            c, r = _rpn_level_conv1x1(
                x, self.cls_wt, self.cls_b2, self.reg_wt, self.reg_b2)
            cls_out.append(c.reshape(N, A, H, W))
            reg_out.append(r.reshape(N, 4 * A, H, W))
        return cls_out, reg_out


# ----------------------------------------------------------------------------
# Self-test
# ----------------------------------------------------------------------------
if __name__ == "__main__":
    key = jax.random.PRNGKey(0)
    k_in1, k_in2, k_params = jax.random.split(key, 3)

    ch = 4
    num_anchor = 3
    # Two feature-map levels, NCHW (matching PyTorch conv input layout).
    x1 = jax.random.normal(k_in1, (2, ch, 16, 16), jnp.float32)
    x2 = jax.random.normal(k_in2, (2, ch, 8, 8), jnp.float32)
    x_list = [x1, x2]

    head = RPNHeadPallas(ch, num_anchor, k_params)
    cls_out, reg_out = head(x_list)
    jax.block_until_ready(cls_out)
    jax.block_until_ready(reg_out)

    # Reference check in plain JAX (1x1 conv == channel matmul).
    for y, c, r in zip(x_list, cls_out, reg_out):
        ref_c = jnp.einsum("nchw,co->nohw", y, head.cls_w) \
            + head.cls_b[None, :, None, None]
        ref_r = jnp.einsum("nchw,co->nohw", y, head.reg_w) \
            + head.reg_b[None, :, None, None]
        assert c.shape == (y.shape[0], num_anchor * 1, y.shape[2], y.shape[3])
        assert r.shape == (y.shape[0], num_anchor * 4, y.shape[2], y.shape[3])
        assert jnp.allclose(c, ref_c, atol=1e-5), "cls mismatch"
        assert jnp.allclose(r, ref_r, atol=1e-5), "reg mismatch"

    print("KERNEL_OK")
</pallas_src>

<mosaic_0001>
module attributes {stable_mosaic.version = 11 : i64} {
  func.func @_rpn_head_kernel(%arg0: i32, %arg1: i32, %arg2: memref<1x4x256xf32, #tpu.memory_space<vmem>>, %arg3: memref<3x4xf32, #tpu.memory_space<vmem>>, %arg4: memref<3x1xf32, #tpu.memory_space<vmem>>, %arg5: memref<12x4xf32, #tpu.memory_space<vmem>>, %arg6: memref<12x1xf32, #tpu.memory_space<vmem>>, %arg7: memref<1x3x256xf32, #tpu.memory_space<vmem>>, %arg8: memref<1x12x256xf32, #tpu.memory_space<vmem>>) attributes {dimension_semantics = [#tpu.dimension_semantics<parallel>, #tpu.dimension_semantics<parallel>], iteration_bounds = array<i64: 2, 1>, scalar_prefetch = 0 : i64, scratch_operands = 0 : i64, tpu.core_type = #tpu.core_type<tc>, window_params = [{transform_indices = @transform_0, window_bounds = array<i64: 1, 4, 256>}, {pipeline_mode = #tpu.pipeline_mode<synchronous>, transform_indices = @transform_1, window_bounds = array<i64: 3, 4>}, {pipeline_mode = #tpu.pipeline_mode<synchronous>, transform_indices = @transform_2, window_bounds = array<i64: 3, 1>}, {pipeline_mode = #tpu.pipeline_mode<synchronous>, transform_indices = @transform_3, window_bounds = array<i64: 12, 4>}, {pipeline_mode = #tpu.pipeline_mode<synchronous>, transform_indices = @transform_4, window_bounds = array<i64: 12, 1>}, {transform_indices = @transform_5, window_bounds = array<i64: 1, 3, 256>}, {transform_indices = @transform_6, window_bounds = array<i64: 1, 12, 256>}]} {
    %c0 = arith.constant 0 : index
    %c0_0 = arith.constant 0 : index
    %c0_1 = arith.constant 0 : index
    %0 = vector.load %arg2[%c0, %c0_0, %c0_1] : memref<1x4x256xf32, #tpu.memory_space<vmem>>, vector<1x4x256xf32>
    %1 = vector.shape_cast %0 : vector<1x4x256xf32> to vector<4x256xf32>
    %c0_2 = arith.constant 0 : index
    %c0_3 = arith.constant 0 : index
    %2 = vector.load %arg3[%c0_2, %c0_3] : memref<3x4xf32, #tpu.memory_space<vmem>>, vector<3x4xf32>
    %c0_4 = arith.constant 0 : index
    %c0_5 = arith.constant 0 : index
    %3 = vector.load %arg5[%c0_4, %c0_5] : memref<12x4xf32, #tpu.memory_space<vmem>>, vector<12x4xf32>
    %4 = vector.extract_strided_slice %2 {offsets = [0, 0], sizes = [3, 1], strides = [1, 1]} : vector<3x4xf32> to vector<3x1xf32>
    %5 = vector.extract_strided_slice %1 {offsets = [0, 0], sizes = [1, 256], strides = [1, 1]} : vector<4x256xf32> to vector<1x256xf32>
    %6 = vector.broadcast %4 : vector<3x1xf32> to vector<3x256xf32>
    %7 = vector.broadcast %5 : vector<1x256xf32> to vector<3x256xf32>
    %8 = arith.mulf %6, %7 : vector<3x256xf32>
    %9 = vector.extract_strided_slice %3 {offsets = [0, 0], sizes = [12, 1], strides = [1, 1]} : vector<12x4xf32> to vector<12x1xf32>
    %10 = vector.extract_strided_slice %1 {offsets = [0, 0], sizes = [1, 256], strides = [1, 1]} : vector<4x256xf32> to vector<1x256xf32>
    %11 = vector.broadcast %9 : vector<12x1xf32> to vector<12x256xf32>
    %12 = vector.broadcast %10 : vector<1x256xf32> to vector<12x256xf32>
    %13 = arith.mulf %11, %12 : vector<12x256xf32>
    %14 = vector.extract_strided_slice %1 {offsets = [1, 0], sizes = [1, 256], strides = [1, 1]} : vector<4x256xf32> to vector<1x256xf32>
    %15 = vector.extract_strided_slice %2 {offsets = [0, 1], sizes = [3, 1], strides = [1, 1]} : vector<3x4xf32> to vector<3x1xf32>
    %16 = vector.broadcast %15 : vector<3x1xf32> to vector<3x256xf32>
    %17 = vector.broadcast %14 : vector<1x256xf32> to vector<3x256xf32>
    %18 = arith.mulf %16, %17 : vector<3x256xf32>
    %19 = arith.addf %8, %18 : vector<3x256xf32>
    %20 = vector.extract_strided_slice %3 {offsets = [0, 1], sizes = [12, 1], strides = [1, 1]} : vector<12x4xf32> to vector<12x1xf32>
    %21 = vector.broadcast %20 : vector<12x1xf32> to vector<12x256xf32>
    %22 = vector.broadcast %14 : vector<1x256xf32> to vector<12x256xf32>
    %23 = arith.mulf %21, %22 : vector<12x256xf32>
    %24 = arith.addf %13, %23 : vector<12x256xf32>
    %25 = vector.extract_strided_slice %1 {offsets = [2, 0], sizes = [1, 256], strides = [1, 1]} : vector<4x256xf32> to vector<1x256xf32>
    %26 = vector.extract_strided_slice %2 {offsets = [0, 2], sizes = [3, 1], strides = [1, 1]} : vector<3x4xf32> to vector<3x1xf32>
    %27 = vector.broadcast %26 : vector<3x1xf32> to vector<3x256xf32>
    %28 = vector.broadcast %25 : vector<1x256xf32> to vector<3x256xf32>
    %29 = arith.mulf %27, %28 : vector<3x256xf32>
    %30 = arith.addf %19, %29 : vector<3x256xf32>
    %31 = vector.extract_strided_slice %3 {offsets = [0, 2], sizes = [12, 1], strides = [1, 1]} : vector<12x4xf32> to vector<12x1xf32>
    %32 = vector.broadcast %31 : vector<12x1xf32> to vector<12x256xf32>
    %33 = vector.broadcast %25 : vector<1x256xf32> to vector<12x256xf32>
    %34 = arith.mulf %32, %33 : vector<12x256xf32>
    %35 = arith.addf %24, %34 : vector<12x256xf32>
    %36 = vector.extract_strided_slice %1 {offsets = [3, 0], sizes = [1, 256], strides = [1, 1]} : vector<4x256xf32> to vector<1x256xf32>
    %37 = vector.extract_strided_slice %2 {offsets = [0, 3], sizes = [3, 1], strides = [1, 1]} : vector<3x4xf32> to vector<3x1xf32>
    %38 = vector.broadcast %37 : vector<3x1xf32> to vector<3x256xf32>
    %39 = vector.broadcast %36 : vector<1x256xf32> to vector<3x256xf32>
    %40 = arith.mulf %38, %39 : vector<3x256xf32>
    %41 = arith.addf %30, %40 : vector<3x256xf32>
    %42 = vector.extract_strided_slice %3 {offsets = [0, 3], sizes = [12, 1], strides = [1, 1]} : vector<12x4xf32> to vector<12x1xf32>
    %43 = vector.broadcast %42 : vector<12x1xf32> to vector<12x256xf32>
    %44 = vector.broadcast %36 : vector<1x256xf32> to vector<12x256xf32>
    %45 = arith.mulf %43, %44 : vector<12x256xf32>
    %46 = arith.addf %35, %45 : vector<12x256xf32>
    %c0_6 = arith.constant 0 : index
    %c0_7 = arith.constant 0 : index
    %47 = vector.load %arg4[%c0_6, %c0_7] : memref<3x1xf32, #tpu.memory_space<vmem>>, vector<3x1xf32>
    %48 = vector.broadcast %47 : vector<3x1xf32> to vector<3x256xf32>
    %49 = arith.addf %41, %48 : vector<3x256xf32>
    %c0_8 = arith.constant 0 : index
    %c0_9 = arith.constant 0 : index
    %c0_10 = arith.constant 0 : index
    %50 = vector.load %arg7[%c0_8, %c0_9, %c0_10] : memref<1x3x256xf32, #tpu.memory_space<vmem>>, vector<1x3x256xf32>
    %51 = vector.shape_cast %50 : vector<1x3x256xf32> to vector<3x256xf32>
    %52 = vector.shape_cast %49 : vector<3x256xf32> to vector<1x3x256xf32>
    tpu.vector_store %arg7[%c0_8, %c0_9, %c0_10], %52 {strides = array<i32>} : memref<1x3x256xf32, #tpu.memory_space<vmem>>, vector<1x3x256xf32>,
    %c0_11 = arith.constant 0 : index
    %c0_12 = arith.constant 0 : index
    %53 = vector.load %arg6[%c0_11, %c0_12] : memref<12x1xf32, #tpu.memory_space<vmem>>, vector<12x1xf32>
    %54 = vector.broadcast %53 : vector<12x1xf32> to vector<12x256xf32>
    %55 = arith.addf %46, %54 : vector<12x256xf32>
    %c0_13 = arith.constant 0 : index
    %c0_14 = arith.constant 0 : index
    %c0_15 = arith.constant 0 : index
    %56 = vector.load %arg8[%c0_13, %c0_14, %c0_15] : memref<1x12x256xf32, #tpu.memory_space<vmem>>, vector<1x12x256xf32>
    %57 = vector.shape_cast %56 : vector<1x12x256xf32> to vector<12x256xf32>
    %58 = vector.shape_cast %55 : vector<12x256xf32> to vector<1x12x256xf32>
    tpu.vector_store %arg8[%c0_13, %c0_14, %c0_15], %58 {strides = array<i32>} : memref<1x12x256xf32, #tpu.memory_space<vmem>>, vector<1x12x256xf32>,
    return
  }
  func.func @transform_0(%arg0: i32, %arg1: i32) -> (i32, i32, i32) {
    %c0_i32 = arith.constant 0 : i32
    %c0_i32_0 = arith.constant 0 : i32
    return %arg0, %c0_i32, %arg1 : i32, i32, i32
  }
  func.func @transform_1(%arg0: i32, %arg1: i32) -> (i32, i32) {
    %c0_i32 = arith.constant 0 : i32
    %c0_i32_0 = arith.constant 0 : i32
    %c0_i32_1 = arith.constant 0 : i32
    return %c0_i32, %c0_i32_0 : i32, i32
  }
  func.func @transform_2(%arg0: i32, %arg1: i32) -> (i32, i32) {
    %c0_i32 = arith.constant 0 : i32
    %c0_i32_0 = arith.constant 0 : i32
    %c0_i32_1 = arith.constant 0 : i32
    return %c0_i32, %c0_i32_0 : i32, i32
  }
  func.func @transform_3(%arg0: i32, %arg1: i32) -> (i32, i32) {
    %c0_i32 = arith.constant 0 : i32
    %c0_i32_0 = arith.constant 0 : i32
    %c0_i32_1 = arith.constant 0 : i32
    return %c0_i32, %c0_i32_0 : i32, i32
  }
  func.func @transform_4(%arg0: i32, %arg1: i32) -> (i32, i32) {
    %c0_i32 = arith.constant 0 : i32
    %c0_i32_0 = arith.constant 0 : i32
    %c0_i32_1 = arith.constant 0 : i32
    return %c0_i32, %c0_i32_0 : i32, i32
  }
  func.func @transform_5(%arg0: i32, %arg1: i32) -> (i32, i32, i32) {
    %c0_i32 = arith.constant 0 : i32
    %c0_i32_0 = arith.constant 0 : i32
    return %arg0, %c0_i32, %arg1 : i32, i32, i32
  }
  func.func @transform_6(%arg0: i32, %arg1: i32) -> (i32, i32, i32) {
    %c0_i32 = arith.constant 0 : i32
    %c0_i32_0 = arith.constant 0 : i32
    return %arg0, %c0_i32, %arg1 : i32, i32, i32
  }
}

</mosaic_0001>

<llo_original>
// kernel: tpu_custom_call.1
$region0: #{tpu_custom_call.1}
  #allocation0 [shape = 'u32[]', space=smem, size = 0x4, offset = 0x4, fixed_abs, tag = 'smem constant byte address 0x4 - core index']
  #allocation1 [shape = 'u32[144,128]{1,0:T(1,128)}', space=vmem, size = 0x12000, scoped, tag = 'internal scratch']
  %s0 = inlined_call_operand.vmem [shape: f32[2,4,256], index: 0, kind: input, shape index: {}]
  %s1 = inlined_call_operand.vmem [shape: f32[3,4], index: 1, kind: input, shape index: {}]
  %s2 = inlined_call_operand.vmem [shape: f32[3,1], index: 2, kind: input, shape index: {}]
  %s3 = inlined_call_operand.vmem [shape: f32[12,4], index: 3, kind: input, shape index: {}]
  %s4 = inlined_call_operand.vmem [shape: f32[12,1], index: 4, kind: input, shape index: {}]
  %s5 = inlined_call_operand.vmem [shape: f32[2,3,256], index: 5, kind: output, shape index: {0}]
  %s6 = inlined_call_operand.vmem [shape: f32[2,12,256], index: 6, kind: output, shape index: {1}]
  %7 = xla_tuple %s5, %s6
  %s8 = sld [smem:[#allocation0]]
  $region61: #{tpu_custom_call.1} parent=0
    _
  %s10 = ssub.s32 1, %s8
  %s11 = scalar_select 0, %s10, %s8
  loop: start=0, step=1, limit=4
  $region2: #{tpu_custom_call.1} parent=0 // loop_pre_header
    _
  $region3: #{tpu_custom_call.1} parent=0 // loop_header
    %s13 = sphi 0, %s17
    %p14 = scmp.ge.s32.totalorder %s13, 4
    %s20 = sphi 0, %s32
    %s21 = sphi 0, %s28
    %s22 = sphi 0, %s20
    %s23 = sphi 0, %s21
    %s24 = sphi 0, %s22
    %s25 = sphi 0, %s23
    %s37 = sphi 0, %s39
    %s40 = sphi 0, %s37
    %s41 = sphi 0, %s40
    %s57 = sphi 0, %s41
    %s61 = sphi 0, %s61
    %s63 = sphi 0, %s61
    %s64 = sphi 0, %s63
    %s78 = sphi 0, %s64
    %s82 = sphi 0, %s82
    %s84 = sphi 0, %s82
    %s85 = sphi 0, %s84
    %s99 = sphi 0, %s85
    %s103 = sphi 0, %s103
    %s105 = sphi 0, %s103
    %s106 = sphi 0, %s105
    %s120 = sphi 0, %s106
    %s124 = sphi 0, %s124
    %s126 = sphi 0, %s124
    %s127 = sphi 0, %s126
    %s141 = sphi 0, %s127
    %s149 = sphi 0, %s151
    %s152 = sphi 0, %s149
    %s153 = sphi 0, %s152
    %s169 = sphi 0, %s153
    %s177 = sphi 0, %s179
    %s180 = sphi 0, %s177
    %s181 = sphi 0, %s180
    %s197 = sphi 0, %s181
  $region4: #{tpu_custom_call.1} parent=0 // loop_header_branch
    %16 = sbr.rel (%p14) target = $region8
  $region5: #{tpu_custom_call.1} parent=0 // loop_body
    %s18 = ssub.s32 %s13, 1
    %s19 = ssub.s32 %s13, 2
    %s26 = sadd.s32 1, %s21
    %p27 = scmp.ge.s32.totalorder %s26, 1
    %s28 = scalar_select %p27, 0, %s26
    %s29 = sadd.s32 1, %s20
    %s30 = scalar_select %p27, %s29, %s20
    %p31 = scmp.ge.s32.totalorder %s30, 2
    %s32 = scalar_select %p31, 0, %s30
    %s33 = ssub.s32 %s20, %s32
    %s34 = ssub.s32 %s21, %s28
    %s35 = sor.u32 %s33, %s34
    %p36 = scmp.eq.s32.totalorder %s35, 0
    %s38 = sadd.s32 %s37, 1
    %s39 = scalar_select %p36, %s37, %s38
    %p42 = pneg %p36
    %p43 = scmp.eq.s32.totalorder %s13, 1
    %p44 = por %p42, %p43
    %p45 = scmp.ne.s32.totalorder %s37, %s40
    %p46 = scmp.eq.s32.totalorder %s13, 0
    %p47 = por %p45, %p46
    %p48 = scmp.ne.s32.totalorder %s37, %s40
    %p49 = scmp.eq.s32.totalorder %s18, 1
    %p50 = por %p48, %p49
    %p51 = scmp.ne.s32.totalorder %s40, %s41
    %p52 = scmp.eq.s32.totalorder %s18, 0
    %p53 = por %p51, %p52
    %p54 = scmp.ne.s32.totalorder %s40, %s41
    %p55 = scmp.eq.s32.totalorder %s19, 1
    %p56 = por %p54, %p55
    %p58 = scmp.ne.s32.totalorder %s41, %s57
    %p59 = scmp.eq.s32.totalorder %s19, 0
    %p60 = por %p58, %p59
    %s62 = sadd.s32 %s61, 1
    %p65 = scmp.eq.s32.totalorder %s13, 1
    %p66 = scmp.ne.s32.totalorder %s61, %s63
    %p67 = scmp.eq.s32.totalorder %s13, 0
    %p68 = por %p66, %p67
    %p69 = scmp.ne.s32.totalorder %s61, %s63
    %p70 = scmp.eq.s32.totalorder %s18, 1
    %p71 = por %p69, %p70
    %p72 = scmp.ne.s32.totalorder %s63, %s64
    %p73 = scmp.eq.s32.totalorder %s18, 0
    %p74 = por %p72, %p73
    %p75 = scmp.ne.s32.totalorder %s63, %s64
    %p76 = scmp.eq.s32.totalorder %s19, 1
    %p77 = por %p75, %p76
    %p79 = scmp.ne.s32.totalorder %s64, %s78
    %p80 = scmp.eq.s32.totalorder %s19, 0
    %p81 = por %p79, %p80
    %s83 = sadd.s32 %s82, 1
    %p86 = scmp.eq.s32.totalorder %s13, 1
    %p87 = scmp.ne.s32.totalorder %s82, %s84
    %p88 = scmp.eq.s32.totalorder %s13, 0
    %p89 = por %p87, %p88
    %p90 = scmp.ne.s32.totalorder %s82, %s84
    %p91 = scmp.eq.s32.totalorder %s18, 1
    %p92 = por %p90, %p91
    %p93 = scmp.ne.s32.totalorder %s84, %s85
    %p94 = scmp.eq.s32.totalorder %s18, 0
    %p95 = por %p93, %p94
    %p96 = scmp.ne.s32.totalorder %s84, %s85
    %p97 = scmp.eq.s32.totalorder %s19, 1
    %p98 = por %p96, %p97
    %p100 = scmp.ne.s32.totalorder %s85, %s99
    %p101 = scmp.eq.s32.totalorder %s19, 0
    %p102 = por %p100, %p101
    %s104 = sadd.s32 %s103, 1
    %p107 = scmp.eq.s32.totalorder %s13, 1
    %p108 = scmp.ne.s32.totalorder %s103, %s105
    %p109 = scmp.eq.s32.totalorder %s13, 0
    %p110 = por %p108, %p109
    %p111 = scmp.ne.s32.totalorder %s103, %s105
    %p112 = scmp.eq.s32.totalorder %s18, 1
    %p113 = por %p111, %p112
    %p114 = scmp.ne.s32.totalorder %s105, %s106
    %p115 = scmp.eq.s32.totalorder %s18, 0
    %p116 = por %p114, %p115
    %p117 = scmp.ne.s32.totalorder %s105, %s106
    %p118 = scmp.eq.s32.totalorder %s19, 1
    %p119 = por %p117, %p118
    %p121 = scmp.ne.s32.totalorder %s106, %s120
    %p122 = scmp.eq.s32.totalorder %s19, 0
    %p123 = por %p121, %p122
    %s125 = sadd.s32 %s124, 1
    %p128 = scmp.eq.s32.totalorder %s13, 1
    %p129 = scmp.ne.s32.totalorder %s124, %s126
    %p130 = scmp.eq.s32.totalorder %s13, 0
    %p131 = por %p129, %p130
    %p132 = scmp.ne.s32.totalorder %s124, %s126
    %p133 = scmp.eq.s32.totalorder %s18, 1
    %p134 = por %p132, %p133
    %p135 = scmp.ne.s32.totalorder %s126, %s127
    %p136 = scmp.eq.s32.totalorder %s18, 0
    %p137 = por %p135, %p136
    %p138 = scmp.ne.s32.totalorder %s126, %s127
    %p139 = scmp.eq.s32.totalorder %s19, 1
    %p140 = por %p138, %p139
    %p142 = scmp.ne.s32.totalorder %s127, %s141
    %p143 = scmp.eq.s32.totalorder %s19, 0
    %p144 = por %p142, %p143
    %s145 = ssub.s32 %s20, %s32
    %s146 = ssub.s32 %s21, %s28
    %s147 = sor.u32 %s145, %s146
    %p148 = scmp.eq.s32.totalorder %s147, 0
    %s150 = sadd.s32 %s149, 1
    %s151 = scalar_select %p148, %s149, %s150
    %p154 = pneg %p148
    %p155 = scmp.eq.s32.totalorder %s13, 1
    %p156 = por %p154, %p155
    %p157 = scmp.ne.s32.totalorder %s149, %s152
    %p158 = scmp.eq.s32.totalorder %s13, 0
    %p159 = por %p157, %p158
    %p160 = scmp.ne.s32.totalorder %s149, %s152
    %p161 = scmp.eq.s32.totalorder %s18, 1
    %p162 = por %p160, %p161
    %p163 = scmp.ne.s32.totalorder %s152, %s153
    %p164 = scmp.eq.s32.totalorder %s18, 0
    %p165 = por %p163, %p164
    %p166 = scmp.ne.s32.totalorder %s152, %s153
    %p167 = scmp.eq.s32.totalorder %s19, 1
    %p168 = por %p166, %p167
    %p170 = scmp.ne.s32.totalorder %s153, %s169
    %p171 = scmp.eq.s32.totalorder %s19, 0
    %p172 = por %p170, %p171
    %s173 = ssub.s32 %s20, %s32
    %s174 = ssub.s32 %s21, %s28
    %s175 = sor.u32 %s173, %s174
    %p176 = scmp.eq.s32.totalorder %s175, 0
    %s178 = sadd.s32 %s177, 1
    %s179 = scalar_select %p176, %s177, %s178
    %p182 = pneg %p176
    %p183 = scmp.eq.s32.totalorder %s13, 1
    %p184 = por %p182, %p183
    %p185 = scmp.ne.s32.totalorder %s177, %s180
    %p186 = scmp.eq.s32.totalorder %s13, 0
    %p187 = por %p185, %p186
    %p188 = scmp.ne.s32.totalorder %s177, %s180
    %p189 = scmp.eq.s32.totalorder %s18, 1
    %p190 = por %p188, %p189
    %p191 = scmp.ne.s32.totalorder %s180, %s181
    %p192 = scmp.eq.s32.totalorder %s18, 0
    %p193 = por %p191, %p192
    %p194 = scmp.ne.s32.totalorder %s180, %s181
    %p195 = scmp.eq.s32.totalorder %s19, 1
    %p196 = por %p194, %p195
    %p198 = scmp.ne.s32.totalorder %s181, %s197
    %p199 = scmp.eq.s32.totalorder %s19, 0
    %p200 = por %p198, %p199
    %p201 = scmp.le.s32.totalorder 1, %s13
    %p202 = scmp.lt.s32.totalorder %s13, 3
    %p203 = pnand %p201, %p202
    %p204 = pneg %p203
    // Predicated region
    $region9: #{tpu_custom_call.1} parent=5 // pred_check
      _
    $region10: #{tpu_custom_call.1} parent=5 // pred_check_branch
      %206 = sbr.rel (%p203) target = $region12
    $region11: #{tpu_custom_call.1} parent=5 // pred_region
      %s207 = ssub.s32 %s13, 1
      // Predicated region
      $region13: #{tpu_custom_call.1} parent=11 // pred_check
        %p208 = pneg %p74
      $region14: #{tpu_custom_call.1} parent=11 // pred_check_branch
        %210 = sbr.rel (%p208) target = $region16
      $region15: #{tpu_custom_call.1} parent=11 // pred_region
        _
      $region16: #{tpu_custom_call.1} parent=11 // pred_fallthru
        _
      // Predicated region
      $region17: #{tpu_custom_call.1} parent=11 // pred_check
        %p211 = pneg %p95
      $region18: #{tpu_custom_call.1} parent=11 // pred_check_branch
        %213 = sbr.rel (%p211) target = $region20
      $region19: #{tpu_custom_call.1} parent=11 // pred_region
        _
      $region20: #{tpu_custom_call.1} parent=11 // pred_fallthru
        _
      // Predicated region
      $region21: #{tpu_custom_call.1} parent=11 // pred_check
        %p214 = pneg %p116
      $region22: #{tpu_custom_call.1} parent=11 // pred_check_branch
        %216 = sbr.rel (%p214) target = $region24
      $region23: #{tpu_custom_call.1} parent=11 // pred_region
        _
      $region24: #{tpu_custom_call.1} parent=11 // pred_fallthru
        _
      // Predicated region
      $region25: #{tpu_custom_call.1} parent=11 // pred_check
        %p217 = pneg %p137
      $region26: #{tpu_custom_call.1} parent=11 // pred_check_branch
        %219 = sbr.rel (%p217) target = $region28
      $region27: #{tpu_custom_call.1} parent=11 // pred_region
        _
      $region28: #{tpu_custom_call.1} parent=11 // pred_fallthru
        _
    $region12: #{tpu_custom_call.1} parent=5 // pred_fallthru
      _
    %p220 = scmp.lt.s32.totalorder %s13, 2
    // Predicated region
    $region29: #{tpu_custom_call.1} parent=5 // pred_check
      %p221 = pneg %p220
    $region30: #{tpu_custom_call.1} parent=5 // pred_check_branch
      %223 = sbr.rel (%p221) target = $region32
    $region31: #{tpu_custom_call.1} parent=5 // pred_region
      // Predicated region
      $region33: #{tpu_custom_call.1} parent=31 // pred_check
        %p224 = pneg %p47
      $region34: #{tpu_custom_call.1} parent=31 // pred_check_branch
        %226 = sbr.rel (%p224) target = $region36
      $region35: #{tpu_custom_call.1} parent=31 // pred_region
        %s227 = smul.u32 2, %s21
        %p228 = scmp.lt.s32.totalorder %s20, 1
        %s229 = scalar_select %p228, %s20, 1
        %p230 = scmp.lt.s32.totalorder %s227, 1
        %s231 = scalar_select %p230, %s227, 1
        %s232 = smul.addr %s229, 2
        %s233 = sadd.s32 %s231, %s232
        %s234 = smul.addr %s233, 4
        %s235 = scalar_lea.vmem %s0, %s234
        %s236 = smul.u32 2, %s21
      $region36: #{tpu_custom_call.1} parent=31 // pred_fallthru
        _
    $region32: #{tpu_custom_call.1} parent=5 // pred_fallthru
      _
    %p237 = scmp.le.s32.totalorder 1, %s13
    %p238 = scmp.lt.s32.totalorder %s13, 3
    %p239 = pnand %p237, %p238
    %p240 = pneg %p239
    // Predicated region
    $region37: #{tpu_custom_call.1} parent=5 // pred_check
      _
    $region38: #{tpu_custom_call.1} parent=5 // pred_check_branch
      %242 = sbr.rel (%p239) target = $region40
    $region39: #{tpu_custom_call.1} parent=5 // pred_region
      %s243 = ssub.s32 %s13, 1
      %s244 = smul.u32 2, %s23
      %p245 = scmp.lt.s32.totalorder %s22, 1
      %s246 = scalar_select %p245, %s22, 1
      %p247 = scmp.lt.s32.totalorder %s244, 1
      %s248 = scalar_select %p247, %s244, 1
      %s249 = smul.addr %s246, 2
      %s250 = sadd.s32 %s248, %s249
      %s251 = smul.addr %s250, 4
      %s252 = scalar_lea.vmem %s0, %s251
      %p253 = pneg %p53
      %p254 = pneg %p50
      %p255 = pneg %p74
      %p256 = pneg %p71
      %p257 = pneg %p95
      %p258 = pneg %p92
      %p259 = pneg %p116
      %p260 = pneg %p113
      %p261 = pneg %p137
      %p262 = pneg %p134
      %p263 = pneg %p165
      %p264 = pneg %p162
      %s265 = smul.u32 2, %s23
      %p266 = scmp.lt.s32.totalorder %s22, 1
      %s267 = scalar_select %p266, %s22, 1
      %p268 = scmp.lt.s32.totalorder %s265, 1
      %s269 = scalar_select %p268, %s265, 1
      %s270 = smul.addr %s267, 2
      %s271 = sadd.s32 %s269, %s270
      %s272 = smul.addr %s271, 4
      %s273 = scalar_lea.vmem %s5, %s272
      %p274 = pneg %p193
      %p275 = pneg %p190
      %s276 = smul.u32 2, %s23
      %p277 = scmp.lt.s32.totalorder %s22, 1
      %s278 = scalar_select %p277, %s22, 1
      %p279 = scmp.lt.s32.totalorder %s276, 1
      %s280 = scalar_select %p279, %s276, 1
      %s281 = smul.addr %s278, 4
      %s282 = sadd.s32 %s280, %s281
      %s283 = smul.addr %s282, 8
      %s284 = scalar_lea.vmem %s6, %s283
      %s285 = smul.u32 2, %s23
      %p286 = scmp.lt.s32.totalorder %s22, 1
      %s287 = scalar_select %p286, %s22, 1
      %p288 = scmp.lt.s32.totalorder %s285, 1
      %s289 = scalar_select %p288, %s285, 1
      %s290 = smul.addr %s287, 2
      %s291 = sadd.s32 %s289, %s290
      %s292 = smul.addr %s291, 4
      %s293 = scalar_lea.vmem %s0, %s292
      %s294 = smul.u32 2, %s23
      %s295 = smul.u32 2, %s23
      %p296 = scmp.lt.s32.totalorder %s22, 1
      %s297 = scalar_select %p296, %s22, 1
      %p298 = scmp.lt.s32.totalorder %s295, 1
      %s299 = scalar_select %p298, %s295, 1
      %s300 = smul.addr %s297, 2
      %s301 = sadd.s32 %s299, %s300
      %s302 = smul.addr %s301, 4
      %s303 = scalar_lea.vmem %s5, %s302
      %s304 = smul.u32 2, %s23
      %s305 = smul.u32 2, %s23
      %p306 = scmp.lt.s32.totalorder %s22, 1
      %s307 = scalar_select %p306, %s22, 1
      %p308 = scmp.lt.s32.totalorder %s305, 1
      %s309 = scalar_select %p308, %s305, 1
      %s310 = smul.addr %s307, 4
      %s311 = sadd.s32 %s309, %s310
      %s312 = smul.addr %s311, 8
      %s313 = scalar_lea.vmem %s6, %s312
      %s314 = smul.u32 2, %s23
      %v315 = vld [vmem:[%s293] sm:$0xff]
      %v316 = vld [vmem:[%s1] sm:$0x7]
      %v317 = vld [vmem:[%s3] sm:$0xff]
      %v318 = vld [vmem:[%s3 + $0x8] sm:$0xf]
      %320 = vset.pattern.permute.xlu0 0
      %321 = vperm.xlu0 %320, %v316
      %v322 = vpop.permute.xlu0 %321
      %v325 = vlaneseq
      %v326 = vshrl.u32 %v325, 7
      %v327 = vsub.s32 0, %v326
      %v328 = vrot.slane %v315, %v327
      %v329 = vlaneseq
      %v330 = vshrl.u32 %v329, 7
      %v331 = vsub.s32 4, %v330
      %v332 = vrot.slane %v315, %v331
      %v335 = vlaneseq
      %v336 = vshrl.u32 %v335, 7
      %v337 = vsub.s32 0, %v336
      %v338 = vrot.slane %v328, %v337
      %v339 = vlaneseq
      %v340 = vshrl.u32 %v339, 7
      %v341 = vsub.s32 0, %v340
      %v342 = vrot.slane %v332, %v341
      %v343 = vmul.f32 %v322, %v338
      %v344 = vmul.f32 %v322, %v342
      %346 = vset.pattern.permute.xlu0 0
      %347 = vperm.xlu0 %346, %v317
      %v348 = vpop.permute.xlu0 %347
      %351 = vset.pattern.permute.xlu0 0
      %352 = vperm.xlu0 %351, %v318
      %v353 = vpop.permute.xlu0 %352
      %v355 = vmul.f32 %v348, %v338
      %v356 = vmul.f32 %v348, %v342
      %v357 = vmul.f32 %v353, %v338
      %v358 = vmul.f32 %v353, %v342
      %359 = vset.pattern.permute.xlu0 1
      %360 = vperm.xlu0 %359, %v316
      %v361 = vpop.permute.xlu0 %360
      %v363 = vlaneseq
      %v364 = vshrl.u32 %v363, 7
      %v365 = vsub.s32 1, %v364
      %v366 = vrot.slane %v315, %v365
      %v367 = vlaneseq
      %v368 = vshrl.u32 %v367, 7
      %v369 = vsub.s32 5, %v368
      %v370 = vrot.slane %v315, %v369
      %v373 = vlaneseq
      %v374 = vshrl.u32 %v373, 7
      %v375 = vsub.s32 1, %v374
      %v376 = vrot.slane %v366, %v375
      %v377 = vlaneseq
      %v378 = vshrl.u32 %v377, 7
      %v379 = vsub.s32 1, %v378
      %v380 = vrot.slane %v370, %v379
      %v381 = vmul.f32 %v361, %v376
      %v382 = vmul.f32 %v361, %v380
      %v383 = vadd.f32 %v343, %v381
      %v384 = vadd.f32 %v344, %v382
      %385 = vset.pattern.permute.xlu0 1
      %386 = vperm.xlu0 %385, %v317
      %v387 = vpop.permute.xlu0 %386
      %389 = vset.pattern.permute.xlu0 1
      %390 = vperm.xlu0 %389, %v318
      %v391 = vpop.permute.xlu0 %390
      %v393 = vmul.f32 %v387, %v376
      %v394 = vmul.f32 %v387, %v380
      %v395 = vmul.f32 %v391, %v376
      %v396 = vmul.f32 %v391, %v380
      %v397 = vadd.f32 %v355, %v393
      %v398 = vadd.f32 %v356, %v394
      %v399 = vadd.f32 %v357, %v395
      %v400 = vadd.f32 %v358, %v396
      %401 = vset.pattern.permute.xlu0 2
      %402 = vperm.xlu0 %401, %v316
      %v403 = vpop.permute.xlu0 %402
      %v405 = vlaneseq
      %v406 = vshrl.u32 %v405, 7
      %v407 = vsub.s32 2, %v406
      %v408 = vrot.slane %v315, %v407
      %v409 = vlaneseq
      %v410 = vshrl.u32 %v409, 7
      %v411 = vsub.s32 6, %v410
      %v412 = vrot.slane %v315, %v411
      %v415 = vlaneseq
      %v416 = vshrl.u32 %v415, 7
      %v417 = vsub.s32 2, %v416
      %v418 = vrot.slane %v408, %v417
      %v419 = vlaneseq
      %v420 = vshrl.u32 %v419, 7
      %v421 = vsub.s32 2, %v420
      %v422 = vrot.slane %v412, %v421
      %v423 = vmul.f32 %v403, %v418
      %v424 = vmul.f32 %v403, %v422
      %v425 = vadd.f32 %v383, %v423
      %v426 = vadd.f32 %v384, %v424
      %427 = vset.pattern.permute.xlu0 2
      %428 = vperm.xlu0 %427, %v317
      %v429 = vpop.permute.xlu0 %428
      %431 = vset.pattern.permute.xlu0 2
      %432 = vperm.xlu0 %431, %v318
      %v433 = vpop.permute.xlu0 %432
      %v435 = vmul.f32 %v429, %v418
      %v436 = vmul.f32 %v429, %v422
      %v437 = vmul.f32 %v433, %v418
      %v438 = vmul.f32 %v433, %v422
      %v439 = vadd.f32 %v397, %v435
      %v440 = vadd.f32 %v398, %v436
      %v441 = vadd.f32 %v399, %v437
      %v442 = vadd.f32 %v400, %v438
      %443 = vset.pattern.permute.xlu0 3
      %444 = vperm.xlu0 %443, %v316
      %v445 = vpop.permute.xlu0 %444
      %v447 = vlaneseq
      %v448 = vshrl.u32 %v447, 7
      %v449 = vsub.s32 3, %v448
      %v450 = vrot.slane %v315, %v449
      %v451 = vlaneseq
      %v452 = vshrl.u32 %v451, 7
      %v453 = vsub.s32 7, %v452
      %v454 = vrot.slane %v315, %v453
      %v457 = vlaneseq
      %v458 = vshrl.u32 %v457, 7
      %v459 = vsub.s32 3, %v458
      %v460 = vrot.slane %v450, %v459
      %v461 = vlaneseq
      %v462 = vshrl.u32 %v461, 7
      %v463 = vsub.s32 3, %v462
      %v464 = vrot.slane %v454, %v463
      %v465 = vmul.f32 %v445, %v460
      %v466 = vmul.f32 %v445, %v464
      %v467 = vadd.f32 %v425, %v465
      %v468 = vadd.f32 %v426, %v466
      %469 = vset.pattern.permute.xlu0 3
      %470 = vperm.xlu0 %469, %v317
      %v471 = vpop.permute.xlu0 %470
      %473 = vset.pattern.permute.xlu0 3
      %474 = vperm.xlu0 %473, %v318
      %v475 = vpop.permute.xlu0 %474
      %v477 = vmul.f32 %v471, %v460
      %v478 = vmul.f32 %v471, %v464
      %v479 = vmul.f32 %v475, %v460
      %v480 = vmul.f32 %v475, %v464
      %v481 = vadd.f32 %v439, %v477
      %v482 = vadd.f32 %v440, %v478
      %v483 = vadd.f32 %v441, %v479
      %v484 = vadd.f32 %v442, %v480
      %v485 = vld [vmem:[%s2] sm:$0x7]
      %487 = vset.pattern.permute.xlu0 0
      %488 = vperm.xlu0 %487, %v485
      %v489 = vpop.permute.xlu0 %488
      %v491 = vadd.f32 %v467, %v489
      %v492 = vadd.f32 %v468, %v489
      %v495 = vcombine.low %v491, %v492
      %497 = vst [vmem:[%s303] sm:$0x77] %v495
      %v498 = vld [vmem:[%s4] sm:$0xff]
      %v499 = vld [vmem:[%s4 + $0x8] sm:$0xf]
      %501 = vset.pattern.permute.xlu0 0
      %502 = vperm.xlu0 %501, %v498
      %v503 = vpop.permute.xlu0 %502
      %506 = vset.pattern.permute.xlu0 0
      %507 = vperm.xlu0 %506, %v499
      %v508 = vpop.permute.xlu0 %507
      %v510 = vadd.f32 %v481, %v503
      %v511 = vadd.f32 %v482, %v503
      %v512 = vadd.f32 %v483, %v508
      %v513 = vadd.f32 %v484, %v508
      %514 = vst [vmem:[%s313] sm:$0xff] %v510
      %515 = vst [vmem:[%s313 + $0x8] sm:$0xff] %v511
      %516 = vst [vmem:[%s313 + $0x10] sm:$0xf] %v512
      %517 = vst [vmem:[%s313 + $0x18] sm:$0xf] %v513
      %s518 = smul.u32 2, %s23
      %p519 = scmp.lt.s32.totalorder %s22, 1
      %s520 = scalar_select %p519, %s22, 1
      %p521 = scmp.lt.s32.totalorder %s518, 1
      %s522 = scalar_select %p521, %s518, 1
      %s523 = smul.addr %s520, 2
      %s524 = sadd.s32 %s522, %s523
      %s525 = smul.addr %s524, 4
      %s526 = scalar_lea.vmem %s5, %s525
      %s527 = smul.u32 2, %s23
      %p528 = scmp.lt.s32.totalorder %s22, 1
      %s529 = scalar_select %p528, %s22, 1
      %p530 = scmp.lt.s32.totalorder %s527, 1
      %s531 = scalar_select %p530, %s527, 1
      %s532 = smul.addr %s529, 4
      %s533 = sadd.s32 %s531, %s532
      %s534 = smul.addr %s533, 8
      %s535 = scalar_lea.vmem %s6, %s534
      // Predicated region
      $region41: #{tpu_custom_call.1} parent=39 // pred_check
        %p536 = pneg %p162
      $region42: #{tpu_custom_call.1} parent=39 // pred_check_branch
        %538 = sbr.rel (%p536) target = $region44
      $region43: #{tpu_custom_call.1} parent=39 // pred_region
        %s539 = smul.u32 2, %s23
      $region44: #{tpu_custom_call.1} parent=39 // pred_fallthru
        _
      // Predicated region
      $region45: #{tpu_custom_call.1} parent=39 // pred_check
        %p540 = pneg %p190
      $region46: #{tpu_custom_call.1} parent=39 // pred_check_branch
        %542 = sbr.rel (%p540) target = $region48
      $region47: #{tpu_custom_call.1} parent=39 // pred_region
        %s543 = smul.u32 2, %s23
      $region48: #{tpu_custom_call.1} parent=39 // pred_fallthru
        _
    $region40: #{tpu_custom_call.1} parent=5 // pred_fallthru
      _
    %p544 = scmp.le.s32.totalorder 2, %s13
    // Predicated region
    $region49: #{tpu_custom_call.1} parent=5 // pred_check
      %p545 = pneg %p544
    $region50: #{tpu_custom_call.1} parent=5 // pred_check_branch
      %547 = sbr.rel (%p545) target = $region52
    $region51: #{tpu_custom_call.1} parent=5 // pred_region
      %s548 = ssub.s32 %s13, 2
      // Predicated region
      $region53: #{tpu_custom_call.1} parent=51 // pred_check
        %p549 = pneg %p168
      $region54: #{tpu_custom_call.1} parent=51 // pred_check_branch
        %551 = sbr.rel (%p549) target = $region56
      $region55: #{tpu_custom_call.1} parent=51 // pred_region
        %s552 = smul.u32 2, %s25
        %p553 = scmp.lt.s32.totalorder %s24, 1
        %s554 = scalar_select %p553, %s24, 1
        %p555 = scmp.lt.s32.totalorder %s552, 1
        %s556 = scalar_select %p555, %s552, 1
        %s557 = smul.addr %s554, 2
        %s558 = sadd.s32 %s556, %s557
        %s559 = smul.addr %s558, 4
        %s560 = scalar_lea.vmem %s5, %s559
      $region56: #{tpu_custom_call.1} parent=51 // pred_fallthru
        _
      // Predicated region
      $region57: #{tpu_custom_call.1} parent=51 // pred_check
        %p561 = pneg %p196
      $region58: #{tpu_custom_call.1} parent=51 // pred_check_branch
        %563 = sbr.rel (%p561) target = $region60
      $region59: #{tpu_custom_call.1} parent=51 // pred_region
        %s564 = smul.u32 2, %s25
        %p565 = scmp.lt.s32.totalorder %s24, 1
        %s566 = scalar_select %p565, %s24, 1
        %p567 = scmp.lt.s32.totalorder %s564, 1
        %s568 = scalar_select %p567, %s564, 1
        %s569 = smul.addr %s566, 4
        %s570 = sadd.s32 %s568, %s569
        %s571 = smul.addr %s570, 8
        %s572 = scalar_lea.vmem %s6, %s571
      $region60: #{tpu_custom_call.1} parent=51 // pred_fallthru
        _
    $region52: #{tpu_custom_call.1} parent=5 // pred_fallthru
      _
  $region6: #{tpu_custom_call.1} parent=0 // loop_footer
    %s17 = sadd.s32 1, %s13
  $region7: #{tpu_custom_call.1} parent=0 // loop_footer_branch
    %12 = sbr.rel target = $region3
  $region8: #{tpu_custom_call.1} parent=0 // loop_exit
    _

</llo_original>
